<compile_context>
chip_gen: v7x
topology: tpu7x:2x2x1
jax: 0.10.0
libtpu: 0.0.40
codegen_flags: <defaults>
</compile_context>

<pallas_src>
import math

import jax
import jax.numpy as jnp
from jax import lax
from jax.experimental import pallas as pl
from jax.experimental.pallas import tpu as pltpu


def fm_kernel(x_ref, w_ref, b_ref, o_ref):
    # x_ref: (TB, Dp) f32   w_ref: (1, Dp) f32   b_ref: (1, 1) f32 SMEM
    # o_ref: (1, TB) f32  (lane-dense output slab)
    x = x_ref[...]
    w = w_ref[...]
    bias = b_ref[0, 0]

    # FeaturesLinear: contract D-with-D -> (1, TB) on the MXU.
    lin = lax.dot_general(
        w, x,
        dimension_numbers=(((1,), (1,)), ((), ())),
        preferred_element_type=jnp.float32,
    )

    # FMLayer_Dense on x.unsqueeze(1): with num_fields == 1,
    #   square_of_sum = (sum over the size-1 field axis)^2 = x**2
    #   sum_of_square = x**2
    # so interaction = 0.5 * sum(x**2 - x**2) == 0 exactly. No compute needed.
    o_ref[...] = lin + bias


def _round_up(n, m):
    return ((n + m - 1) // m) * m


def factorization_machine(x, weight, bias):
    """x: (B, D) f32, weight: (1, D) f32, bias: scalar f32. Returns (B,) f32."""
    B, D = x.shape
    x = x.astype(jnp.float32)
    weight = weight.astype(jnp.float32)

    # Lane-align D; zero padding leaves the dot product unchanged.
    Dp = _round_up(D, 128)
    # Batch tile: large for streaming, lane-aligned for the (1, TB) output slab.
    TB = min(512, _round_up(B, 128))
    Bp = _round_up(B, TB)

    x_p = jnp.pad(x, ((0, Bp - B), (0, Dp - D)))
    w_p = jnp.pad(weight, ((0, 0), (0, Dp - D)))
    bias2d = jnp.reshape(bias.astype(jnp.float32), (1, 1))

    # VMEM budget: double-buffered x tile + resident W + double-buffered output.
    vmem_bytes = 2 * (TB * Dp + Dp + TB) * 4 + (4 << 20)
    vmem_bytes = max(min(vmem_bytes, 64 << 20), 16 << 20)

    out = pl.pallas_call(
        fm_kernel,
        out_shape=jax.ShapeDtypeStruct((1, Bp), jnp.float32),
        grid_spec=pl.GridSpec(
            grid=(Bp // TB,),
            in_specs=[
                pl.BlockSpec((TB, Dp), lambda i: (i, 0)),                 # x tile
                pl.BlockSpec((1, Dp), lambda i: (0, 0)),                  # W resident
                pl.BlockSpec((1, 1), lambda i: (0, 0),
                             memory_space=pltpu.SMEM),                    # bias scalar
            ],
            out_specs=pl.BlockSpec((1, TB), lambda i: (0, i)),            # lane-dense
        ),
        compiler_params=pltpu.CompilerParams(
            dimension_semantics=("parallel",),
            vmem_limit_bytes=vmem_bytes,
        ),
    )(x_p, w_p, bias2d)

    return out[0, :B]


def init_params(key, input_dim):
    """Deterministic xavier_uniform_ init for Linear(input_dim, 1), bias = 0."""
    fan_in, fan_out = input_dim, 1
    limit = math.sqrt(6.0 / (fan_in + fan_out))
    weight = jax.random.uniform(key, (1, input_dim), dtype=jnp.float32,
                                minval=-limit, maxval=limit)
    bias = jnp.zeros((), dtype=jnp.float32)
    return weight, bias


if __name__ == "__main__":
    key = jax.random.PRNGKey(0)
    kx, kw = jax.random.split(key)

    batch, input_dim = 8, 32
    x = jax.random.normal(kx, (batch, input_dim), dtype=jnp.float32)
    weight, bias = init_params(kw, input_dim)

    out = factorization_machine(x, weight, bias)
    out = jax.block_until_ready(out)

    # Reference check in plain JAX (same math as the PyTorch forward).
    linear_ref = x @ weight.T + bias                      # (B, 1)
    x3 = x[:, None, :]                                    # (B, 1, D)
    sq_of_sum = jnp.sum(x3, axis=1) ** 2
    sum_of_sq = jnp.sum(x3 ** 2, axis=1)
    fm_ref = 0.5 * jnp.sum(sq_of_sum - sum_of_sq, axis=1)
    ref = linear_ref[:, 0] + fm_ref

    assert out.shape == (batch,)
    assert jnp.allclose(out, ref, atol=1e-5, rtol=1e-5)
    print("KERNEL_OK")
</pallas_src>

<mosaic_0001>
module attributes {stable_mosaic.version = 11 : i64} {
  func.func @fm_kernel(%arg0: i32, %arg1: memref<128x128xf32, #tpu.memory_space<vmem>>, %arg2: memref<1x128xf32, #tpu.memory_space<vmem>>, %arg3: memref<1x1xf32, #tpu.memory_space<smem>>, %arg4: memref<1x128xf32, #tpu.memory_space<vmem>>) attributes {dimension_semantics = [#tpu.dimension_semantics<parallel>], iteration_bounds = array<i64: 1>, scalar_prefetch = 0 : i64, scratch_operands = 0 : i64, tpu.core_type = #tpu.core_type<tc>, window_params = [{transform_indices = @transform_0, window_bounds = array<i64: 128, 128>}, {pipeline_mode = #tpu.pipeline_mode<synchronous>, transform_indices = @transform_1, window_bounds = array<i64: 1, 128>}, {transform_indices = @transform_2, window_bounds = array<i64: 1, 1>}, {transform_indices = @transform_3, window_bounds = array<i64: 1, 128>}]} {
    %c0 = arith.constant 0 : index
    %c0_0 = arith.constant 0 : index
    %0 = vector.load %arg1[%c0, %c0_0] : memref<128x128xf32, #tpu.memory_space<vmem>>, vector<128x128xf32>
    %c0_1 = arith.constant 0 : index
    %c0_2 = arith.constant 0 : index
    %1 = vector.load %arg2[%c0_1, %c0_2] : memref<1x128xf32, #tpu.memory_space<vmem>>, vector<1x128xf32>
    %c0_3 = arith.constant 0 : index
    %c0_4 = arith.constant 0 : index
    %2 = memref.load %arg3[%c0_3, %c0_4] : memref<1x1xf32, #tpu.memory_space<smem>>
    %cst = arith.constant dense<0.000000e+00> : vector<1x128xf32>
    %3 = tpu.matmul %1, %0, %cst {dimension_numbers = #tpu.dot_dimension_numbers<[1], [1], [0], [0], [0, 0, 1, 0], [], []>} : vector<1x128xf32>, vector<128x128xf32>, vector<1x128xf32> -> vector<1x128xf32>
    %4 = vector.broadcast %2 : f32 to vector<1x128xf32>
    %5 = arith.addf %3, %4 : vector<1x128xf32>
    %c0_5 = arith.constant 0 : index
    %c0_6 = arith.constant 0 : index
    %6 = vector.load %arg4[%c0_5, %c0_6] : memref<1x128xf32, #tpu.memory_space<vmem>>, vector<1x128xf32>
    tpu.vector_store %arg4[%c0_5, %c0_6], %5 {strides = array<i32>} : memref<1x128xf32, #tpu.memory_space<vmem>>, vector<1x128xf32>,
    return
  }
  func.func @transform_0(%arg0: i32) -> (i32, i32) {
    %c0_i32 = arith.constant 0 : i32
    %c0_i32_0 = arith.constant 0 : i32
    return %arg0, %c0_i32 : i32, i32
  }
  func.func @transform_1(%arg0: i32) -> (i32, i32) {
    %c0_i32 = arith.constant 0 : i32
    %c0_i32_0 = arith.constant 0 : i32
    %c0_i32_1 = arith.constant 0 : i32
    return %c0_i32, %c0_i32_0 : i32, i32
  }
  func.func @transform_2(%arg0: i32) -> (i32, i32) {
    %c0_i32 = arith.constant 0 : i32
    %c0_i32_0 = arith.constant 0 : i32
    %c0_i32_1 = arith.constant 0 : i32
    return %c0_i32, %c0_i32_0 : i32, i32
  }
  func.func @transform_3(%arg0: i32) -> (i32, i32) {
    %c0_i32 = arith.constant 0 : i32
    %c0_i32_0 = arith.constant 0 : i32
    return %c0_i32, %arg0 : i32, i32
  }
}

</mosaic_0001>

<llo_original>
// kernel: tpu_custom_call.1
$region0: #{tpu_custom_call.1}
  #allocation0 [shape = 'u32[]', space=smem, size = 0x4, offset = 0x4, fixed_abs, tag = 'smem constant byte address 0x4 - core index']
  #allocation1 [shape = 'u32[144,128]{1,0:T(1,128)}', space=vmem, size = 0x12000, scoped, tag = 'internal scratch']
  #allocation2 [shape = 'f32[1,1]{1,0:T(1,128)S(6)}', space=smem, size = 0x200, scoped, tag = 'scoped memory for tpu_custom_call.1']
  %s0 = inlined_call_operand.hbm [shape: f32[128,128], index: 0, kind: input, shape index: {}]
  %s1 = inlined_call_operand.vmem [shape: f32[1,128], index: 1, kind: input, shape index: {}]
  %s2 = inlined_call_operand.<no memory space> [shape: f32[1,1], index: 2, kind: input, shape index: {}]
  %s3 = inlined_call_operand.hbm [shape: f32[1,128], index: 3, kind: output, shape index: {}]
  %s4 = sld [smem:[#allocation0]]
  $region26: #{tpu_custom_call.1} parent=0
    _
  %s6 = ssub.s32 1, %s4
  %s7 = scalar_select 0, %s6, %s4
  %8 = sst [smem:[#allocation2]] %s2
  $region1: #{tpu_custom_call.1} parent=0
    #allocation3 [shape = 'u8[65536]{0}', space=vmem, size = 0x10000, scoped, tag = 'input window, operand 0, single buffered']
    #allocation4 [shape = 's32[1]{0}', space=sflag, size = 0x4, scoped, tag = 'scoped memory for tpu_custom_call.1']
    #allocation5 [shape = 's32[1]{0}', space=sflag, size = 0x4, scoped, tag = 'scoped memory for tpu_custom_call.1']
    #allocation6 [shape = 'u8[512]{0}', space=vmem, size = 0x400, scoped, tag = 'output window, operand 0, single buffered']
    %9 = vsyncpa [#allocation4], 0
    %10 = vsyncpa [#allocation5], 0
    // Predicated region
    $region2: #{tpu_custom_call.1} parent=1 // pred_check
      _
    $region3: #{tpu_custom_call.1} parent=1 // pred_check_branch
      %12 = sbr.rel (0) target = $region5
    $region4: #{tpu_custom_call.1} parent=1 // pred_region
      %s14 = ssub.s32 2048, 2048
      %15 = vsyncadd [#allocation4], %s14
      %s16 = sshll.u32 [#allocation3], 4
      %s17 = int_to_ptr.vmem [resolvable:$true] %s16
      %22 = dma.hbm_to_vmem [thread:$0]  %s0, 2048, %s17, [#allocation4], 128, 128, 8
    $region5: #{tpu_custom_call.1} parent=1 // pred_fallthru
      _
    // Predicated region
    $region6: #{tpu_custom_call.1} parent=1 // pred_check
      _
    $region7: #{tpu_custom_call.1} parent=1 // pred_check_branch
      %24 = sbr.rel (0) target = $region9
    $region8: #{tpu_custom_call.1} parent=1 // pred_region
      _
    $region9: #{tpu_custom_call.1} parent=1 // pred_fallthru
      _
    // Predicated region
    $region10: #{tpu_custom_call.1} parent=1 // pred_check
      _
    $region11: #{tpu_custom_call.1} parent=1 // pred_check_branch
      %26 = sbr.rel (0) target = $region13
    $region12: #{tpu_custom_call.1} parent=1 // pred_region
      _
    $region13: #{tpu_custom_call.1} parent=1 // pred_fallthru
      _
    // Predicated region
    $region14: #{tpu_custom_call.1} parent=1 // pred_check
      _
    $region15: #{tpu_custom_call.1} parent=1 // pred_check_branch
      %28 = sbr.rel (0) target = $region17
    $region16: #{tpu_custom_call.1} parent=1 // pred_region
      %29 = dma.done [#allocation4], 2048
    $region17: #{tpu_custom_call.1} parent=1 // pred_fallthru
      _
    %v30 = vld [vmem:[#allocation3] sm:$0xff]
    %v31 = vld [vmem:[#allocation3 + $0x8] sm:$0xff]
    %v32 = vld [vmem:[#allocation3 + $0x10] sm:$0xff]
    %v33 = vld [vmem:[#allocation3 + $0x18] sm:$0xff]
    %v34 = vld [vmem:[#allocation3 + $0x20] sm:$0xff]
    %v35 = vld [vmem:[#allocation3 + $0x28] sm:$0xff]
    %v36 = vld [vmem:[#allocation3 + $0x30] sm:$0xff]
    %v37 = vld [vmem:[#allocation3 + $0x38] sm:$0xff]
    %v38 = vld [vmem:[#allocation3 + $0x40] sm:$0xff]
    %v39 = vld [vmem:[#allocation3 + $0x48] sm:$0xff]
    %v40 = vld [vmem:[#allocation3 + $0x50] sm:$0xff]
    %v41 = vld [vmem:[#allocation3 + $0x58] sm:$0xff]
    %v42 = vld [vmem:[#allocation3 + $0x60] sm:$0xff]
    %v43 = vld [vmem:[#allocation3 + $0x68] sm:$0xff]
    %v44 = vld [vmem:[#allocation3 + $0x70] sm:$0xff]
    %v45 = vld [vmem:[#allocation3 + $0x78] sm:$0xff]
    %v46 = vld [vmem:[%s1] sm:$0x1]
    %s47 = sld [smem:[#allocation2]]
    %v48 = vstv %s47
    %49 = vmatprep.subr.mxu0 0.0
    %50 = vmatpush1.xpose.msra.mxu0 %v30
    %51 = vmatprep.subr.mxu0 0.0
    %52 = vmatpush1.xpose.msra.mxu0 %v31
    %53 = vmatprep.subr.mxu0 0.0
    %54 = vmatpush1.xpose.msra.mxu0 %v32
    %55 = vmatprep.subr.mxu0 0.0
    %56 = vmatpush1.xpose.msra.mxu0 %v33
    %57 = vmatprep.subr.mxu0 0.0
    %58 = vmatpush1.xpose.msra.mxu0 %v34
    %59 = vmatprep.subr.mxu0 0.0
    %60 = vmatpush1.xpose.msra.mxu0 %v35
    %61 = vmatprep.subr.mxu0 0.0
    %62 = vmatpush1.xpose.msra.mxu0 %v36
    %63 = vmatprep.subr.mxu0 0.0
    %64 = vmatpush1.xpose.msra.mxu0 %v37
    %65 = vmatprep.subr.mxu0 0.0
    %66 = vmatpush1.xpose.msra.mxu0 %v38
    %67 = vmatprep.subr.mxu0 0.0
    %68 = vmatpush1.xpose.msra.mxu0 %v39
    %69 = vmatprep.subr.mxu0 0.0
    %70 = vmatpush1.xpose.msra.mxu0 %v40
    %71 = vmatprep.subr.mxu0 0.0
    %72 = vmatpush1.xpose.msra.mxu0 %v41
    %73 = vmatprep.subr.mxu0 0.0
    %74 = vmatpush1.xpose.msra.mxu0 %v42
    %75 = vmatprep.subr.mxu0 0.0
    %76 = vmatpush1.xpose.msra.mxu0 %v43
    %77 = vmatprep.subr.mxu0 0.0
    %78 = vmatpush1.xpose.msra.mxu0 %v44
    %79 = vmatprep.subr.mxu0 0.0
    %80 = vmatpush1.xpose.msra.mxu0 %v45
    %81 = vmatprep.subr.mxu0 0.0
    %82 = vmatpush1.xpose.msra.mxu0 0.0
    %83 = vmatprep.subr.mxu0 0.0
    %84 = vmatpush1.xpose.msra.mxu0 0.0
    %85 = vmatprep.subr.mxu0 0.0
    %86 = vmatpush1.xpose.msra.mxu0 0.0
    %87 = vmatprep.subr.mxu0 0.0
    %88 = vmatpush1.xpose.msra.mxu0 0.0
    %89 = vmatprep.subr.mxu0 0.0
    %90 = vmatpush1.xpose.msra.mxu0 0.0
    %91 = vmatprep.subr.mxu0 0.0
    %92 = vmatpush1.xpose.msra.mxu0 0.0
    %93 = vmatprep.subr.mxu0 0.0
    %94 = vmatpush1.xpose.msra.mxu0 0.0
    %95 = vmatprep.subr.mxu0 0.0
    %96 = vmatpush1.xpose.msra.mxu0 0.0
    %97 = vmatprep.subr.mxu0 0.0
    %98 = vmatpush1.xpose.msra.mxu0 0.0
    %99 = vmatprep.subr.mxu0 0.0
    %100 = vmatpush1.xpose.msra.mxu0 0.0
    %101 = vmatprep.subr.mxu0 0.0
    %102 = vmatpush1.xpose.msra.mxu0 0.0
    %103 = vmatprep.subr.mxu0 0.0
    %104 = vmatpush1.xpose.msra.mxu0 0.0
    %105 = vmatprep.subr.mxu0 0.0
    %106 = vmatpush1.xpose.msra.mxu0 0.0
    %107 = vmatprep.subr.mxu0 0.0
    %108 = vmatpush1.xpose.msra.mxu0 0.0
    %109 = vmatprep.subr.mxu0 0.0
    %110 = vmatpush1.xpose.msra.mxu0 0.0
    %111 = vmatprep.subr.mxu0 0.0
    %112 = vmatpush1.xpose.msra.mxu0 0.0
    %113 = vmatprep.mubr.f32.mxu0 0.0
    %114 = vmatmul.mubr.f32.gmra.mrb[0].mxu0 %v46
    %v115 = vpop.f32.mrb[0].mxu0
    %v116 = vadd.f32 %v48, %v115
    %v117 = vpop.f32.mrb[0].mxu0
    %118 = vdwg.mxu0
    %119 = vst [vmem:[#allocation6] sm:$0x1] %v116
    // Predicated region
    $region18: #{tpu_custom_call.1} parent=1 // pred_check
      _
    $region19: #{tpu_custom_call.1} parent=1 // pred_check_branch
      %121 = sbr.rel (0) target = $region21
    $region20: #{tpu_custom_call.1} parent=1 // pred_region
      %s123 = ssub.s32 16, 16
      %124 = vsyncadd [#allocation5], %s123
      %s126 = sshll.u32 [#allocation6], 4
      %s127 = int_to_ptr.vmem [resolvable:$true] %s126
      %129 = dma.vmem_to_hbm [thread:$0]  %s127, 16, %s3, [#allocation5]
    $region21: #{tpu_custom_call.1} parent=1 // pred_fallthru
      _
    // Predicated region
    $region22: #{tpu_custom_call.1} parent=1 // pred_check
      _
    $region23: #{tpu_custom_call.1} parent=1 // pred_check_branch
      %131 = sbr.rel (0) target = $region25
    $region24: #{tpu_custom_call.1} parent=1 // pred_region
      %132 = dma.done [#allocation5], 16
    $region25: #{tpu_custom_call.1} parent=1 // pred_fallthru
      _
    %133 = vsyncpa [#allocation4], 1
    %134 = vsyncpa [#allocation5], 1

</llo_original>
